<compile_context>
chip_gen: v7x
topology: tpu7x:2x2x1
jax: 0.10.0
libtpu: 0.0.40
codegen_flags: <defaults>
</compile_context>

<pallas_src>
import functools

import jax
import jax.numpy as jnp
import numpy as np
from jax.experimental import pallas as pl
from jax.experimental.pallas import tpu as pltpu

_LANE = 128
_MIB = 1024 * 1024


def _vmem_capacity_bytes():
    """Per-TensorCore VMEM capacity, with a conservative (v7x-sized) fallback."""
    try:
        info = pltpu.get_tpu_info()
        cap = int(getattr(info, "vmem_capacity_bytes", 0) or 0)
        if cap > 0:
            return cap
    except Exception:
        pass
    return 64 * _MIB


def _choose_tiling(N, C, HW, itemsize, block_budget):
    """Pick (Nb, t_hw, n_b, n_k, mask_hw) so each x block is ~block_budget bytes."""
    per_batch = C * HW * itemsize
    if HW <= _LANE or per_batch < block_budget:
        # Small spatial extent per batch: whole H*W in one lane-dense block and pack
        # several batch elements per grid step so steps move MiB-scale data.
        t_hw = HW
        n_k = 1
        mask_hw = False
        desired = max(1, block_budget // max(per_batch, 1))
        if desired >= N:
            nb = N
        else:
            nb = desired if desired < 8 else (desired // 8) * 8  # sublane-friendly
        n_b = pl.cdiv(N, nb)
    else:
        # Large images: one batch element per step, tile the flattened spatial axis with
        # a big multiple-of-128 tile; the padded tail tile is masked inside the kernel.
        nb = 1
        t_hw = max(_LANE, (block_budget // (C * itemsize)) // _LANE * _LANE)
        t_hw = min(t_hw, max(_LANE, (HW // _LANE) * _LANE))
        n_k = pl.cdiv(HW, t_hw)
        n_b = N
        mask_hw = (HW % t_hw) != 0
    return nb, t_hw, n_b, n_k, mask_hw


def _channel_attention_kernel(x_ref, wT_ref, b_ref, out_ref, acc_ref,
                              *, inv_hw, hw_total, t_hw, mask_hw):
    """One (batch-block, spatial-tile) grid step.

    x_ref:   (Nb, C, t_hw)  lane-dense spatial tile of Nb images
    wT_ref:  (C, C)         1x1-conv weight transposed to (C_in, C_out)
    b_ref:   (1, C)         bias as a lane-dense row
    out_ref: (Nb, C)        result rows for this batch block
    acc_ref: (Nb, C) f32    running spatial sums (persist across the k axis)
    """
    k = pl.program_id(1)

    @pl.when(k == 0)
    def _init():
        acc_ref[...] = jnp.zeros_like(acc_ref)

    x = x_ref[...].astype(jnp.float32)
    if mask_hw:
        # Zero the out-of-bounds lanes of the (padded) tail tile before summing.
        col = jax.lax.broadcasted_iota(jnp.int32, x.shape, 2) + k * t_hw
        x = jnp.where(col < hw_total, x, 0.0)
    acc_ref[...] += jnp.sum(x, axis=2)

    @pl.when(k == pl.num_programs(1) - 1)
    def _finalize():
        pooled = acc_ref[...] * inv_hw                              # (Nb, C) global mean
        ca = jnp.dot(pooled, wT_ref[...].astype(jnp.float32),
                     preferred_element_type=jnp.float32)
        out_ref[...] = (ca + b_ref[...].astype(jnp.float32)).astype(out_ref.dtype)


def channel_attention(x, conv_w, conv_b):
    """x: (N,C,H,W); conv_w: (C,C,1,1) (PyTorch Conv2d weight); conv_b: (C,).

    Returns (N, C, 1, 1) in x.dtype, matching the PyTorch module output.
    """
    N, C, H, W = x.shape
    HW = H * W
    itemsize = x.dtype.itemsize

    vmem_cap = _vmem_capacity_bytes()
    # Target ~4-16 MiB per streamed block; leave room for up to 3 in-flight buffers.
    block_budget = max(_MIB, min(16 * _MIB, int(0.65 * vmem_cap) // 3))
    nb, t_hw, n_b, n_k, mask_hw = _choose_tiling(N, C, HW, itemsize, block_budget)

    x_block_bytes = nb * C * t_hw * itemsize
    total_steps = n_b * n_k
    nbuf = 3 if (total_steps > 2 and 3 * x_block_bytes <= int(0.75 * vmem_cap)) else 2
    fixed_bytes = 4 * (C * C + 2 * C + 4 * nb * C)                  # weights/bias/out/acc
    vmem_limit = int(min(max(nbuf * x_block_bytes + fixed_bytes + 4 * _MIB, 32 * _MIB),
                         int(0.9 * vmem_cap)))

    x_flat = x.reshape(N, C, HW)
    wT = jnp.transpose(conv_w.reshape(C, C))                        # (C_in, C_out)
    b_row = conv_b.reshape(1, C)

    x_spec_kwargs = {}
    if nbuf == 3:
        x_spec_kwargs["pipeline_mode"] = pl.Buffered(3)
    x_spec = pl.BlockSpec((nb, C, t_hw), lambda b, k: (b, 0, k), **x_spec_kwargs)

    kernel = functools.partial(_channel_attention_kernel,
                               inv_hw=1.0 / float(HW), hw_total=HW,
                               t_hw=t_hw, mask_hw=mask_hw)

    cost = pl.CostEstimate(
        flops=int(N * C * HW + 2 * N * C * C),
        transcendentals=0,
        bytes_accessed=int(N * C * HW * itemsize
                           + (C * C + C) * conv_w.dtype.itemsize
                           + N * C * itemsize),
    )

    # TODO(synk): for N == 1 on v7x (2 TensorCores) add a parallel spatial split that
    # produces (n_split, C) partial sums combined in the wrapper, so both cores stream.
    out = pl.pallas_call(
        kernel,
        out_shape=jax.ShapeDtypeStruct((N, C), x.dtype),
        grid=(n_b, n_k),
        in_specs=[
            x_spec,
            pl.BlockSpec((C, C), lambda b, k: (0, 0)),
            pl.BlockSpec((1, C), lambda b, k: (0, 0)),
        ],
        out_specs=pl.BlockSpec((nb, C), lambda b, k: (b, 0)),
        scratch_shapes=[pltpu.VMEM((nb, C), jnp.float32)],
        compiler_params=pltpu.CompilerParams(
            dimension_semantics=("parallel", "arbitrary"),
            vmem_limit_bytes=vmem_limit),
        cost_estimate=cost,
    )(x_flat, wT, b_row)

    return out.reshape(N, C, 1, 1)


def reference_forward(x, conv_w, conv_b):
    """Pure-JAX reference of the PyTorch forward (for correctness check)."""
    C = x.shape[1]
    pooled = jnp.mean(x.astype(jnp.float32), axis=(2, 3))           # (N, C)
    w2d = conv_w.reshape(C, C).astype(jnp.float32)                  # (C_out, C_in)
    out = pooled @ w2d.T + conv_b.astype(jnp.float32)               # (N, C)
    return out.reshape(out.shape[0], C, 1, 1).astype(x.dtype)


if __name__ == "__main__":
    key = jax.random.PRNGKey(0)
    k1, k2, k3 = jax.random.split(key, 3)

    N, C, H, W = 2, 4, 16, 16
    x = jax.random.normal(k1, (N, C, H, W), jnp.float32)

    # Synthetic parameters with the module's shapes: Conv2d(C, C, kernel_size=1).
    conv_w = jax.random.normal(k2, (C, C, 1, 1), jnp.float32) * 0.1
    conv_b = jax.random.normal(k3, (C,), jnp.float32) * 0.1

    out = jax.block_until_ready(channel_attention(x, conv_w, conv_b))

    ref = reference_forward(x, conv_w, conv_b)
    np.testing.assert_allclose(np.asarray(out), np.asarray(ref),
                               rtol=1e-5, atol=1e-5)
    print("KERNEL_OK")
</pallas_src>

<mosaic_0001>
module attributes {stable_mosaic.version = 11 : i64} {
  func.func @_channel_attention_kernel(%arg0: i32, %arg1: i32, %arg2: memref<2x4x256xf32, #tpu.memory_space<vmem>>, %arg3: memref<4x4xf32, #tpu.memory_space<vmem>>, %arg4: memref<1x4xf32, #tpu.memory_space<vmem>>, %arg5: memref<2x4xf32, #tpu.memory_space<vmem>>, %arg6: memref<2x4xf32, #tpu.memory_space<vmem>>) attributes {dimension_semantics = [#tpu.dimension_semantics<parallel>, #tpu.dimension_semantics<arbitrary>], iteration_bounds = array<i64: 1, 1>, scalar_prefetch = 0 : i64, scratch_operands = 1 : i64, tpu.core_type = #tpu.core_type<tc>, window_params = [{transform_indices = @transform_0, window_bounds = array<i64: 2, 4, 256>}, {pipeline_mode = #tpu.pipeline_mode<synchronous>, transform_indices = @transform_1, window_bounds = array<i64: 4, 4>}, {pipeline_mode = #tpu.pipeline_mode<synchronous>, transform_indices = @transform_2, window_bounds = array<i64: 1, 4>}, {transform_indices = @transform_3, window_bounds = array<i64: 2, 4>}]} {
    %c0_i32 = arith.constant 0 : i32
    %0 = arith.cmpi eq, %arg1, %c0_i32 : i32
    %1 = arith.extui %0 : i1 to i32
    %c0_i32_0 = arith.constant 0 : i32
    %2 = arith.cmpi ne, %1, %c0_i32_0 : i32
    scf.if %2 {
      %cst_9 = arith.constant 0.000000e+00 : f32
      %11 = vector.broadcast %cst_9 : f32 to vector<2x4xf32>
      %c0_10 = arith.constant 0 : index
      %c0_11 = arith.constant 0 : index
      %12 = vector.load %arg6[%c0_10, %c0_11] : memref<2x4xf32, #tpu.memory_space<vmem>>, vector<2x4xf32>
      tpu.vector_store %arg6[%c0_10, %c0_11], %11 {strides = array<i32>} : memref<2x4xf32, #tpu.memory_space<vmem>>, vector<2x4xf32>,
    } else {
    }
    %c0 = arith.constant 0 : index
    %c0_1 = arith.constant 0 : index
    %c0_2 = arith.constant 0 : index
    %3 = vector.load %arg2[%c0, %c0_1, %c0_2] : memref<2x4x256xf32, #tpu.memory_space<vmem>>, vector<2x4x256xf32>
    %c0_3 = arith.constant 0 : index
    %c0_4 = arith.constant 0 : index
    %4 = vector.load %arg6[%c0_3, %c0_4] : memref<2x4xf32, #tpu.memory_space<vmem>>, vector<2x4xf32>
    %cst = arith.constant dense<0.000000e+00> : vector<2x4xf32>
    %5 = vector.multi_reduction <add>, %3, %cst [2] : vector<2x4x256xf32> to vector<2x4xf32>
    %6 = arith.addf %4, %5 : vector<2x4xf32>
    %c0_5 = arith.constant 0 : index
    %c0_6 = arith.constant 0 : index
    %7 = vector.load %arg6[%c0_5, %c0_6] : memref<2x4xf32, #tpu.memory_space<vmem>>, vector<2x4xf32>
    tpu.vector_store %arg6[%c0_5, %c0_6], %6 {strides = array<i32>} : memref<2x4xf32, #tpu.memory_space<vmem>>, vector<2x4xf32>,
    %c0_i32_7 = arith.constant 0 : i32
    %8 = arith.cmpi eq, %arg1, %c0_i32_7 : i32
    %9 = arith.extui %8 : i1 to i32
    %c0_i32_8 = arith.constant 0 : i32
    %10 = arith.cmpi ne, %9, %c0_i32_8 : i32
    scf.if %10 {
      %c0_9 = arith.constant 0 : index
      %c0_10 = arith.constant 0 : index
      %11 = vector.load %arg6[%c0_9, %c0_10] : memref<2x4xf32, #tpu.memory_space<vmem>>, vector<2x4xf32>
      %cst_11 = arith.constant 3.906250e-03 : f32
      %12 = vector.broadcast %cst_11 : f32 to vector<2x4xf32>
      %13 = arith.mulf %11, %12 : vector<2x4xf32>
      %c0_12 = arith.constant 0 : index
      %c0_13 = arith.constant 0 : index
      %14 = vector.load %arg3[%c0_12, %c0_13] : memref<4x4xf32, #tpu.memory_space<vmem>>, vector<4x4xf32>
      %cst_14 = arith.constant dense<0.000000e+00> : vector<2x4xf32>
      %15 = tpu.matmul %13, %14, %cst_14 {dimension_numbers = #tpu.dot_dimension_numbers<[1], [0], [0], [1], [0, 0, 1, 1], [], []>} : vector<2x4xf32>, vector<4x4xf32>, vector<2x4xf32> -> vector<2x4xf32>
      %c0_15 = arith.constant 0 : index
      %c0_16 = arith.constant 0 : index
      %16 = vector.load %arg4[%c0_15, %c0_16] : memref<1x4xf32, #tpu.memory_space<vmem>>, vector<1x4xf32>
      %17 = vector.broadcast %16 : vector<1x4xf32> to vector<2x4xf32>
      %18 = arith.addf %15, %17 : vector<2x4xf32>
      %c0_17 = arith.constant 0 : index
      %c0_18 = arith.constant 0 : index
      %19 = vector.load %arg5[%c0_17, %c0_18] : memref<2x4xf32, #tpu.memory_space<vmem>>, vector<2x4xf32>
      tpu.vector_store %arg5[%c0_17, %c0_18], %18 {strides = array<i32>} : memref<2x4xf32, #tpu.memory_space<vmem>>, vector<2x4xf32>,
    } else {
    }
    return
  }
  func.func @transform_0(%arg0: i32, %arg1: i32) -> (i32, i32, i32) {
    %c0_i32 = arith.constant 0 : i32
    %c0_i32_0 = arith.constant 0 : i32
    return %arg0, %c0_i32, %arg1 : i32, i32, i32
  }
  func.func @transform_1(%arg0: i32, %arg1: i32) -> (i32, i32) {
    %c0_i32 = arith.constant 0 : i32
    %c0_i32_0 = arith.constant 0 : i32
    %c0_i32_1 = arith.constant 0 : i32
    return %c0_i32, %c0_i32_0 : i32, i32
  }
  func.func @transform_2(%arg0: i32, %arg1: i32) -> (i32, i32) {
    %c0_i32 = arith.constant 0 : i32
    %c0_i32_0 = arith.constant 0 : i32
    %c0_i32_1 = arith.constant 0 : i32
    return %c0_i32, %c0_i32_0 : i32, i32
  }
  func.func @transform_3(%arg0: i32, %arg1: i32) -> (i32, i32) {
    %c0_i32 = arith.constant 0 : i32
    %c0_i32_0 = arith.constant 0 : i32
    return %arg0, %c0_i32 : i32, i32
  }
}

</mosaic_0001>

<llo_original>
// kernel: tpu_custom_call.1
$region0: #{tpu_custom_call.1}
  #allocation0 [shape = 'u32[]', space=smem, size = 0x4, offset = 0x4, fixed_abs, tag = 'smem constant byte address 0x4 - core index']
  #allocation1 [shape = 'u32[144,128]{1,0:T(1,128)}', space=vmem, size = 0x12000, scoped, tag = 'internal scratch']
  #allocation2 [shape = 'f32[2,4]{1,0:T(2,128)}', space=vmem, size = 0x400, scoped, tag = 'scratch operand']
  %s0 = inlined_call_operand.hbm [shape: f32[2,4,256], index: 0, kind: input, shape index: {}]
  %s1 = inlined_call_operand.hbm [shape: f32[4,4], index: 1, kind: input, shape index: {}]
  %s2 = inlined_call_operand.vmem [shape: f32[1,4], index: 2, kind: input, shape index: {}]
  %s3 = inlined_call_operand.hbm [shape: f32[2,4], index: 3, kind: output, shape index: {}]
  %s4 = sld [smem:[#allocation0]]
  $region38: #{tpu_custom_call.1} parent=0
    _
  %s6 = ssub.s32 1, %s4
  %s7 = scalar_select 0, %s6, %s4
  $region1: #{tpu_custom_call.1} parent=0
    #allocation3 [shape = 'u8[8192]{0}', space=vmem, size = 0x2000, scoped, tag = 'input window, operand 0, single buffered']
    #allocation4 [shape = 's32[1]{0}', space=sflag, size = 0x4, scoped, tag = 'scoped memory for tpu_custom_call.1']
    #allocation5 [shape = 's32[1]{0}', space=sflag, size = 0x4, scoped, tag = 'scoped memory for tpu_custom_call.1']
    #allocation6 [shape = 'u8[2048]{0}', space=vmem, size = 0x800, scoped, tag = 'input window, operand 1, single buffered']
    #allocation7 [shape = 's32[1]{0}', space=sflag, size = 0x4, scoped, tag = 'scoped memory for tpu_custom_call.1']
    #allocation8 [shape = 'u8[1024]{0}', space=vmem, size = 0x400, scoped, tag = 'output window, operand 0, single buffered']
    %8 = vsyncpa [#allocation4], 0
    %9 = vsyncpa [#allocation7], 0
    %10 = vsyncpa [#allocation5], 0
    // Predicated region
    $region2: #{tpu_custom_call.1} parent=1 // pred_check
      _
    $region3: #{tpu_custom_call.1} parent=1 // pred_check_branch
      %12 = sbr.rel (0) target = $region5
    $region4: #{tpu_custom_call.1} parent=1 // pred_region
      %s14 = ssub.s32 256, 256
      %15 = vsyncadd [#allocation4], %s14
      %s16 = sshll.u32 [#allocation3], 4
      %s17 = int_to_ptr.vmem [resolvable:$true] %s16
      %22 = dma.hbm_to_vmem [thread:$0]  %s0, 256, %s17, [#allocation4], 128, 128, 8
    $region5: #{tpu_custom_call.1} parent=1 // pred_fallthru
      _
    // Predicated region
    $region6: #{tpu_custom_call.1} parent=1 // pred_check
      _
    $region7: #{tpu_custom_call.1} parent=1 // pred_check_branch
      %24 = sbr.rel (0) target = $region9
    $region8: #{tpu_custom_call.1} parent=1 // pred_region
      %s26 = ssub.s32 64, 64
      %27 = vsyncadd [#allocation7], %s26
      %s29 = sshll.u32 [#allocation6], 4
      %s30 = int_to_ptr.vmem [resolvable:$true] %s29
      %32 = dma.hbm_to_vmem [thread:$0]  %s1, 64, %s30, [#allocation7]
    $region9: #{tpu_custom_call.1} parent=1 // pred_fallthru
      _
    // Predicated region
    $region10: #{tpu_custom_call.1} parent=1 // pred_check
      _
    $region11: #{tpu_custom_call.1} parent=1 // pred_check_branch
      %34 = sbr.rel (0) target = $region13
    $region12: #{tpu_custom_call.1} parent=1 // pred_region
      _
    $region13: #{tpu_custom_call.1} parent=1 // pred_fallthru
      _
    // Predicated region
    $region14: #{tpu_custom_call.1} parent=1 // pred_check
      _
    $region15: #{tpu_custom_call.1} parent=1 // pred_check_branch
      %36 = sbr.rel (0) target = $region17
    $region16: #{tpu_custom_call.1} parent=1 // pred_region
      %37 = dma.done [#allocation4], 256
    $region17: #{tpu_custom_call.1} parent=1 // pred_fallthru
      _
    // Predicated region
    $region18: #{tpu_custom_call.1} parent=1 // pred_check
      _
    $region19: #{tpu_custom_call.1} parent=1 // pred_check_branch
      %39 = sbr.rel (0) target = $region21
    $region20: #{tpu_custom_call.1} parent=1 // pred_region
      %40 = dma.done [#allocation7], 64
    $region21: #{tpu_custom_call.1} parent=1 // pred_fallthru
      _
    %p41 = scmp.eq.s32.totalorder 0, 0
    // Predicated region
    $region22: #{tpu_custom_call.1} parent=1 // pred_check
      %p42 = pneg %p41
    $region23: #{tpu_custom_call.1} parent=1 // pred_check_branch
      %44 = sbr.rel (%p42) target = $region25
    $region24: #{tpu_custom_call.1} parent=1 // pred_region
      %vm45 = vcmask 25600
      %46 = vst.msk [vmem:[#allocation2] sm:$0x3] %vm45, 0.0
    $region25: #{tpu_custom_call.1} parent=1 // pred_fallthru
      _
    %v47 = vld [vmem:[#allocation3] sm:$0xff]
    %v48 = vld [vmem:[#allocation3 + $0x8] sm:$0xff]
    %v49 = vld [vmem:[#allocation2] sm:$0x3]
    %v52 = vcombine.high %v47, %v47
    %v53 = vcombine.high %v48, %v48
    %vm56 = vcmask 1043456
    %v57 = vsel %vm56, %v47, 0.0
    %v58 = vsel %vm56, %v52, 0.0
    %v59 = vadd.f32 %v57, %v58
    %60 = vadd.xlane.f32.xlu0 %v59
    %v61 = vpop.xlane.xlu0 %60
    %v62 = vsel %vm56, %v48, 0.0
    %v63 = vsel %vm56, %v53, 0.0
    %v64 = vadd.f32 %v62, %v63
    %65 = vadd.xlane.f32.xlu0 %v64
    %v66 = vpop.xlane.xlu0 %65
    %v69 = vlaneseq
    %v70 = vand.u32 %v69, 127
    %v71 = vlaneseq
    %v72 = vshrl.u32 %v71, 7
    %v73 = vsub.s32 %v70, %v72
    %v74 = vrot.slane %v61, %v73
    %v75 = vlaneseq
    %v76 = vshrl.u32 %v75, 7
    %v77 = vsub.s32 %v70, %v76
    %v78 = vrot.slane %v66, %v77
    %vm79 = vcmask 1041409
    %v80 = vsel %vm79, %v78, %v74
    %v82 = vadd.f32 %v49, %v80
    %vm83 = vcmask 25600
    %84 = vst.msk [vmem:[#allocation2] sm:$0x3] %vm83, %v82
    // Predicated region
    $region26: #{tpu_custom_call.1} parent=1 // pred_check
      %p85 = pneg %p41
    $region27: #{tpu_custom_call.1} parent=1 // pred_check_branch
      %87 = sbr.rel (%p85) target = $region29
    $region28: #{tpu_custom_call.1} parent=1 // pred_region
      %v88 = vld [vmem:[#allocation2] sm:$0x3]
      %v89 = vmul.f32 %v88, 0.00390625
      %v90 = vld [vmem:[#allocation6] sm:$0xf]
      %v91 = vld [vmem:[%s2] sm:$0x1]
      %v93 = vlaneseq
      %v94 = vshrl.u32 %v93, 7
      %v95 = vsub.s32 0, %v94
      %v96 = vrot.slane %v91, %v95
      %vm98 = vcmask 31744
      %v100 = vsel %vm98, %v89, 0
      %v103 = vsel %vm56, %v90, 0
      %105 = vmatprep.subr.mxu0 0.0
      %106 = vmatpush1.msra.mxu0 %v103
      %107 = vmatprep.subr.mxu0 0.0
      %108 = vmatpush1.msra.mxu0 0.0
      %109 = vmatprep.subr.mxu0 0.0
      %110 = vmatpush1.msra.mxu0 0.0
      %111 = vmatprep.subr.mxu0 0.0
      %112 = vmatpush1.msra.mxu0 0.0
      %113 = vmatprep.subr.mxu0 0.0
      %114 = vmatpush1.msra.mxu0 0.0
      %115 = vmatprep.subr.mxu0 0.0
      %116 = vmatpush1.msra.mxu0 0.0
      %117 = vmatprep.subr.mxu0 0.0
      %118 = vmatpush1.msra.mxu0 0.0
      %119 = vmatprep.subr.mxu0 0.0
      %120 = vmatpush1.msra.mxu0 0.0
      %121 = vmatprep.subr.mxu0 0.0
      %122 = vmatpush1.msra.mxu0 0.0
      %123 = vmatprep.subr.mxu0 0.0
      %124 = vmatpush1.msra.mxu0 0.0
      %125 = vmatprep.subr.mxu0 0.0
      %126 = vmatpush1.msra.mxu0 0.0
      %127 = vmatprep.subr.mxu0 0.0
      %128 = vmatpush1.msra.mxu0 0.0
      %129 = vmatprep.subr.mxu0 0.0
      %130 = vmatpush1.msra.mxu0 0.0
      %131 = vmatprep.subr.mxu0 0.0
      %132 = vmatpush1.msra.mxu0 0.0
      %133 = vmatprep.subr.mxu0 0.0
      %134 = vmatpush1.msra.mxu0 0.0
      %135 = vmatprep.subr.mxu0 0.0
      %136 = vmatpush1.msra.mxu0 0.0
      %137 = vmatprep.subr.mxu0 0.0
      %138 = vmatpush1.msra.mxu0 0.0
      %139 = vmatprep.subr.mxu0 0.0
      %140 = vmatpush1.msra.mxu0 0.0
      %141 = vmatprep.subr.mxu0 0.0
      %142 = vmatpush1.msra.mxu0 0.0
      %143 = vmatprep.subr.mxu0 0.0
      %144 = vmatpush1.msra.mxu0 0.0
      %145 = vmatprep.subr.mxu0 0.0
      %146 = vmatpush1.msra.mxu0 0.0
      %147 = vmatprep.subr.mxu0 0.0
      %148 = vmatpush1.msra.mxu0 0.0
      %149 = vmatprep.subr.mxu0 0.0
      %150 = vmatpush1.msra.mxu0 0.0
      %151 = vmatprep.subr.mxu0 0.0
      %152 = vmatpush1.msra.mxu0 0.0
      %153 = vmatprep.subr.mxu0 0.0
      %154 = vmatpush1.msra.mxu0 0.0
      %155 = vmatprep.subr.mxu0 0.0
      %156 = vmatpush1.msra.mxu0 0.0
      %157 = vmatprep.subr.mxu0 0.0
      %158 = vmatpush1.msra.mxu0 0.0
      %159 = vmatprep.subr.mxu0 0.0
      %160 = vmatpush1.msra.mxu0 0.0
      %161 = vmatprep.subr.mxu0 0.0
      %162 = vmatpush1.msra.mxu0 0.0
      %163 = vmatprep.subr.mxu0 0.0
      %164 = vmatpush1.msra.mxu0 0.0
      %165 = vmatprep.subr.mxu0 0.0
      %166 = vmatpush1.msra.mxu0 0.0
      %167 = vmatprep.subr.mxu0 0.0
      %168 = vmatpush1.msra.mxu0 0.0
      %169 = vmatprep.mubr.f32.mxu0 0.0
      %170 = vmatmul.mubr.f32.gmra.mrb[0].mxu0 %v100
      %v171 = vpop.f32.mrb[0].mxu0
      %v172 = vadd.f32 %v96, %v171
      %v173 = vpop.f32.mrb[0].mxu0
      %174 = vdwg.mxu0
      %175 = vst.msk [vmem:[#allocation8] sm:$0x3] %vm83, %v172
    $region29: #{tpu_custom_call.1} parent=1 // pred_fallthru
      _
    // Predicated region
    $region30: #{tpu_custom_call.1} parent=1 // pred_check
      _
    $region31: #{tpu_custom_call.1} parent=1 // pred_check_branch
      %177 = sbr.rel (0) target = $region33
    $region32: #{tpu_custom_call.1} parent=1 // pred_region
      %s179 = ssub.s32 32, 32
      %180 = vsyncadd [#allocation5], %s179
      %s182 = sshll.u32 [#allocation8], 4
      %s183 = int_to_ptr.vmem [resolvable:$true] %s182
      %185 = dma.vmem_to_hbm [thread:$0]  %s183, 32, %s3, [#allocation5]
    $region33: #{tpu_custom_call.1} parent=1 // pred_fallthru
      _
    // Predicated region
    $region34: #{tpu_custom_call.1} parent=1 // pred_check
      _
    $region35: #{tpu_custom_call.1} parent=1 // pred_check_branch
      %187 = sbr.rel (0) target = $region37
    $region36: #{tpu_custom_call.1} parent=1 // pred_region
      %188 = dma.done [#allocation5], 32
    $region37: #{tpu_custom_call.1} parent=1 // pred_fallthru
      _
    %189 = vsyncpa [#allocation4], 1
    %190 = vsyncpa [#allocation7], 1
    %191 = vsyncpa [#allocation5], 1

</llo_original>
